<compile_context>
chip_gen: v5e
topology: v5e:2x2
jax: 0.10.0
libtpu: 0.0.40
codegen_flags: <defaults>
</compile_context>

<pallas_src>
import jax
import jax.numpy as jnp
from jax.experimental import pallas as pl
from jax.experimental.pallas import tpu as pltpu


def _patch_embed_kernel(a_ref, w_ref, add_ref, out_ref):
    # a_ref:   (bm, Kp)  bf16 -- bb images' tokens flattened to rows
    #                            (row 0 of each image = zeros, the cls slot)
    # w_ref:   (Kp, tn)  bf16 -- flattened conv weight tile
    # add_ref: (bm, tn)  f32  -- per-row additive term:
    #                            cls row  = class_token + pos[0]
    #                            patch rows = conv_bias + pos[1:]
    # out_ref: (bm, tn)       -- output tokens
    acc = jnp.dot(a_ref[...], w_ref[...], preferred_element_type=jnp.float32)
    out_ref[...] = (acc + add_ref[...]).astype(out_ref.dtype)


def _round_up(x, m):
    return (x + m - 1) // m * m


def patch_embedding_forward(x, conv_w, conv_b, class_token, pos_embedding,
                            patch_size):
    """x: (N, C, H, W) float32. Returns (N, n_patches + 1, hidden)."""
    n, c, h, w_dim = x.shape
    p = patch_size
    n_h, n_w = h // p, w_dim // p
    n_patches = n_h * n_w
    t = n_patches + 1                      # tokens per image (incl. class token)
    hidden = conv_w.shape[0]
    k = c * p * p
    t_pad = _round_up(t, 8)                # sublane-aligned token count
    k_pad = _round_up(k, 128)              # lane-aligned contraction dim
    h_pad = _round_up(hidden, 128)         # lane-dense output width

    # --- tile / block selection ----------------------------------------------
    if h_pad <= 1024:
        tn = h_pad
    elif h_pad % 512 == 0:
        tn = 512
    elif h_pad % 256 == 0:
        tn = 256
    else:
        tn = 128

    vmem_budget = 24 * 1024 * 1024   # conservative; explicit 32 MiB limit below
    row_cap = 1024                   # up to ~1024 matmul rows per grid step
    bb = 1
    for d in range(n, 0, -1):        # largest divisor of N meeting the budgets
        if n % d:
            continue
        bm_try = d * t_pad
        if d > 1 and bm_try > row_cap:
            continue
        vmem = 2 * (bm_try * k_pad * 2      # bf16 activations (double-buffered)
                    + k_pad * tn * 2        # bf16 weight tile
                    + 2 * bm_try * tn * 4)  # f32 add table + f32 output tile
        if d > 1 and vmem > vmem_budget:
            continue
        bb = d
        break
    bm = bb * t_pad

    # --- glue: patchify NCHW -> (N*T_pad, K_pad) ------------------------------
    # token 0 of each image is a zero row (cls slot); rows T..T_pad-1 are pad.
    patches = x.reshape(n, c, n_h, p, n_w, p)
    patches = patches.transpose(0, 2, 4, 1, 3, 5)          # (N, n_h, n_w, C, P, P)
    patches = patches.reshape(n, n_patches, k)
    tokens = jnp.pad(patches, ((0, 0), (1, t_pad - t), (0, k_pad - k)))
    tokens = tokens.reshape(n * t_pad, k_pad).astype(jnp.bfloat16)

    # flatten conv weight (hidden, C, P, P) -> (K_pad, H_pad), same (c,kh,kw) order
    w_mat = conv_w.reshape(hidden, k).T.astype(jnp.bfloat16)
    w_mat = jnp.pad(w_mat, ((0, k_pad - k), (0, h_pad - hidden)))

    # fold conv bias + positional embedding (+ class token) into one add table
    add = jnp.concatenate(
        [class_token[0] + pos_embedding[0, :1, :],          # class-token row
         conv_b[None, :] + pos_embedding[0, 1:, :]],        # patch-token rows
        axis=0).astype(jnp.float32)                         # (T, hidden)
    add = jnp.pad(add, ((0, t_pad - t), (0, h_pad - hidden)))   # (T_pad, H_pad)
    add_big = jnp.tile(add, (bb, 1))                        # (bm, H_pad): 1 block

    grid = (n // bb, h_pad // tn)

    cost = pl.CostEstimate(
        flops=int(2 * n * t_pad * k_pad * h_pad),
        transcendentals=0,
        bytes_accessed=int(tokens.size * 2 + w_mat.size * 2
                           + add_big.size * 4 + n * t_pad * h_pad * 4),
    )

    out = pl.pallas_call(
        _patch_embed_kernel,
        out_shape=jax.ShapeDtypeStruct((n * t_pad, h_pad), x.dtype),
        grid_spec=pltpu.PrefetchScalarGridSpec(
            num_scalar_prefetch=0,
            grid=grid,
            in_specs=[
                pl.BlockSpec((bm, k_pad), lambda i, j: (i, 0)),
                pl.BlockSpec((k_pad, tn), lambda i, j: (0, j)),
                pl.BlockSpec((bm, tn), lambda i, j: (0, j)),
            ],
            out_specs=pl.BlockSpec((bm, tn), lambda i, j: (i, j)),
        ),
        compiler_params=pltpu.CompilerParams(
            dimension_semantics=("parallel", "parallel"),
            vmem_limit_bytes=32 * 1024 * 1024),
        cost_estimate=cost,
    )(tokens, w_mat, add_big)

    # Strip the token / hidden padding (no-op slices when already aligned,
    # e.g. hidden=768 needs no lane slice).
    out = out.reshape(n, t_pad, h_pad)[:, :t, :hidden]

    # TODO(synk): nn.Dropout is identity in eval mode (and with dropout=0.0);
    # training-mode random dropout is not implemented.
    return out


if __name__ == "__main__":
    # Small ViT-style config: image 16x16, patch 4 -> 16 patches, hidden 32.
    image_size, patch_size, in_channels, hidden_dim = 16, 4, 4, 32
    batch = 2
    n_patches = (image_size // patch_size) ** 2

    key = jax.random.PRNGKey(0)
    k_x, k_w, k_b, k_pos, k_cls = jax.random.split(key, 5)

    x = jax.random.normal(k_x, (batch, in_channels, image_size, image_size),
                          dtype=jnp.float32)
    conv_w = jax.random.normal(
        k_w, (hidden_dim, in_channels, patch_size, patch_size),
        dtype=jnp.float32) * 0.02
    conv_b = jax.random.normal(k_b, (hidden_dim,), dtype=jnp.float32) * 0.02
    class_token = jax.random.normal(k_cls, (1, 1, hidden_dim),
                                    dtype=jnp.float32) * 0.02
    pos_embedding = jax.random.normal(k_pos, (1, n_patches + 1, hidden_dim),
                                      dtype=jnp.float32)

    out = patch_embedding_forward(x, conv_w, conv_b, class_token,
                                  pos_embedding, patch_size)
    jax.block_until_ready(out)

    # sanity: reference in plain JAX (strided conv == patchify matmul), f32
    ref_conv = jax.lax.conv_general_dilated(
        x, conv_w, window_strides=(patch_size, patch_size), padding="VALID",
        dimension_numbers=("NCHW", "OIHW", "NCHW")) + conv_b[None, :, None, None]
    ref = ref_conv.reshape(batch, hidden_dim, n_patches).transpose(0, 2, 1)
    ref = jnp.concatenate(
        [jnp.broadcast_to(class_token, (batch, 1, hidden_dim)), ref], axis=1)
    ref = ref + pos_embedding

    assert out.shape == (batch, n_patches + 1, hidden_dim)
    # bf16 matmul inputs with f32 accumulation -> slightly looser tolerance
    assert jnp.allclose(out, ref, atol=2e-2, rtol=2e-2)

    print("KERNEL_OK")
</pallas_src>

<mosaic_0001>
module attributes {stable_mosaic.version = 11 : i64} {
  func.func @_patch_embed_kernel(%arg0: i32, %arg1: i32, %arg2: memref<48x128xbf16, #tpu.memory_space<vmem>>, %arg3: memref<128x128xbf16, #tpu.memory_space<vmem>>, %arg4: memref<48x128xf32, #tpu.memory_space<vmem>>, %arg5: memref<48x128xf32, #tpu.memory_space<vmem>>) attributes {dimension_semantics = [#tpu.dimension_semantics<parallel>, #tpu.dimension_semantics<parallel>], iteration_bounds = array<i64: 1, 1>, scalar_prefetch = 0 : i64, scratch_operands = 0 : i64, tpu.core_type = #tpu.core_type<tc>, window_params = [{transform_indices = @transform_0, window_bounds = array<i64: 48, 128>}, {transform_indices = @transform_1, window_bounds = array<i64: 128, 128>}, {transform_indices = @transform_2, window_bounds = array<i64: 48, 128>}, {transform_indices = @transform_3, window_bounds = array<i64: 48, 128>}]} {
    %c0 = arith.constant 0 : index
    %c0_0 = arith.constant 0 : index
    %0 = vector.load %arg2[%c0, %c0_0] : memref<48x128xbf16, #tpu.memory_space<vmem>>, vector<48x128xbf16>
    %c0_1 = arith.constant 0 : index
    %c0_2 = arith.constant 0 : index
    %1 = vector.load %arg3[%c0_1, %c0_2] : memref<128x128xbf16, #tpu.memory_space<vmem>>, vector<128x128xbf16>
    %cst = arith.constant dense<0.000000e+00> : vector<48x128xf32>
    %2 = tpu.matmul %0, %1, %cst {dimension_numbers = #tpu.dot_dimension_numbers<[1], [0], [0], [1], [0, 0, 1, 1], [], []>} : vector<48x128xbf16>, vector<128x128xbf16>, vector<48x128xf32> -> vector<48x128xf32>
    %c0_3 = arith.constant 0 : index
    %c0_4 = arith.constant 0 : index
    %3 = vector.load %arg4[%c0_3, %c0_4] : memref<48x128xf32, #tpu.memory_space<vmem>>, vector<48x128xf32>
    %4 = arith.addf %2, %3 : vector<48x128xf32>
    %c0_5 = arith.constant 0 : index
    %c0_6 = arith.constant 0 : index
    %5 = vector.load %arg5[%c0_5, %c0_6] : memref<48x128xf32, #tpu.memory_space<vmem>>, vector<48x128xf32>
    tpu.vector_store %arg5[%c0_5, %c0_6], %4 {strides = array<i32>} : memref<48x128xf32, #tpu.memory_space<vmem>>, vector<48x128xf32>,
    return
  }
  func.func @transform_0(%arg0: i32, %arg1: i32) -> (i32, i32) {
    %c0_i32 = arith.constant 0 : i32
    %c0_i32_0 = arith.constant 0 : i32
    return %arg0, %c0_i32 : i32, i32
  }
  func.func @transform_1(%arg0: i32, %arg1: i32) -> (i32, i32) {
    %c0_i32 = arith.constant 0 : i32
    %c0_i32_0 = arith.constant 0 : i32
    return %c0_i32, %arg1 : i32, i32
  }
  func.func @transform_2(%arg0: i32, %arg1: i32) -> (i32, i32) {
    %c0_i32 = arith.constant 0 : i32
    %c0_i32_0 = arith.constant 0 : i32
    return %c0_i32, %arg1 : i32, i32
  }
  func.func @transform_3(%arg0: i32, %arg1: i32) -> (i32, i32) {
    %c0_i32 = arith.constant 0 : i32
    return %arg0, %arg1 : i32, i32
  }
}

</mosaic_0001>

<llo_original>
// kernel: tpu_custom_call.1
$region0: #{tpu_custom_call.1}
  #allocation0 [shape = 'u32[]', space=smem, size = 0x4, offset = 0x4, fixed_abs, tag = 'smem constant byte address 0x4 - core index']
  #allocation1 [shape = 'u32[72,128]{1,0:T(1,128)}', space=vmem, size = 0x9000, scoped, tag = 'internal scratch']
  %s0 = inlined_call_operand.hbm [shape: bf16[48,128], index: 0, kind: input, shape index: {}]
  %s1 = inlined_call_operand.hbm [shape: bf16[128,128], index: 1, kind: input, shape index: {}]
  %s2 = inlined_call_operand.hbm [shape: f32[48,128], index: 2, kind: input, shape index: {}]
  %s3 = inlined_call_operand.hbm [shape: f32[48,128], index: 3, kind: output, shape index: {}]
  %s4 = sld [smem:[#allocation0]]
  $region34: #{tpu_custom_call.1} parent=0
    _
  %s6 = ssub.s32 1, %s4
  %s7 = scalar_select 0, %s6, %s4
  $region1: #{tpu_custom_call.1} parent=0
    #allocation2 [shape = 'u8[12288]{0}', space=vmem, size = 0x3000, scoped, tag = 'input window, operand 0, single buffered']
    #allocation3 [shape = 's32[1]{0}', space=sflag, size = 0x4, scoped, tag = 'scoped memory for tpu_custom_call.1']
    #allocation4 [shape = 's32[1]{0}', space=sflag, size = 0x4, scoped, tag = 'scoped memory for tpu_custom_call.1']
    #allocation5 [shape = 'u8[32768]{0}', space=vmem, size = 0x8000, scoped, tag = 'input window, operand 1, single buffered']
    #allocation6 [shape = 's32[1]{0}', space=sflag, size = 0x4, scoped, tag = 'scoped memory for tpu_custom_call.1']
    #allocation7 [shape = 'u8[24576]{0}', space=vmem, size = 0x6000, scoped, tag = 'input window, operand 2, single buffered']
    #allocation8 [shape = 'u8[24576]{0}', space=vmem, size = 0x6000, scoped, tag = 'output window, operand 0, single buffered']
    %8 = vsyncpa [#allocation3], 0
    %9 = vsyncpa [#allocation6], 0
    %10 = vsyncpa [#allocation4], 0
    // Predicated region
    $region2: #{tpu_custom_call.1} parent=1 // pred_check
      _
    $region3: #{tpu_custom_call.1} parent=1 // pred_check_branch
      %12 = sbr.rel (0) target = $region5
    $region4: #{tpu_custom_call.1} parent=1 // pred_region
      %14 = vsyncadd [#allocation3], 0
      %s15 = sshll.u32 %s0, 4
      %s16 = int_to_ptr.hbm [resolvable:$true] %s15
      %s17 = sshll.u32 [#allocation2], 4
      %s18 = int_to_ptr.vmem [resolvable:$true] %s17
      %23 = dma.hbm_to_vmem [thread:$0]  %s16, 384, %s18, [#allocation3], 64, 64, 4
    $region5: #{tpu_custom_call.1} parent=1 // pred_fallthru
      _
    // Predicated region
    $region6: #{tpu_custom_call.1} parent=1 // pred_check
      _
    $region7: #{tpu_custom_call.1} parent=1 // pred_check_branch
      %25 = sbr.rel (0) target = $region9
    $region8: #{tpu_custom_call.1} parent=1 // pred_region
      %27 = vsyncadd [#allocation6], 0
      %s28 = sshll.u32 %s1, 4
      %s29 = int_to_ptr.hbm [resolvable:$true] %s28
      %s30 = sshll.u32 [#allocation5], 4
      %s31 = int_to_ptr.vmem [resolvable:$true] %s30
      %36 = dma.hbm_to_vmem [thread:$0]  %s29, 1024, %s31, [#allocation6], 64, 64, 4
    $region9: #{tpu_custom_call.1} parent=1 // pred_fallthru
      _
    // Predicated region
    $region10: #{tpu_custom_call.1} parent=1 // pred_check
      _
    $region11: #{tpu_custom_call.1} parent=1 // pred_check_branch
      %38 = sbr.rel (0) target = $region13
    $region12: #{tpu_custom_call.1} parent=1 // pred_region
      %40 = vsyncadd [#allocation6], 0
      %s41 = sshll.u32 %s2, 4
      %s42 = int_to_ptr.hbm [resolvable:$true] %s41
      %s43 = sshll.u32 [#allocation7], 4
      %s44 = int_to_ptr.vmem [resolvable:$true] %s43
      %49 = dma.hbm_to_vmem [thread:$0]  %s42, 768, %s44, [#allocation6], 128, 128, 8
    $region13: #{tpu_custom_call.1} parent=1 // pred_fallthru
      _
    // Predicated region
    $region14: #{tpu_custom_call.1} parent=1 // pred_check
      _
    $region15: #{tpu_custom_call.1} parent=1 // pred_check_branch
      %51 = sbr.rel (0) target = $region17
    $region16: #{tpu_custom_call.1} parent=1 // pred_region
      %53 = dma.done [#allocation3], 384
    $region17: #{tpu_custom_call.1} parent=1 // pred_fallthru
      _
    // Predicated region
    $region18: #{tpu_custom_call.1} parent=1 // pred_check
      _
    $region19: #{tpu_custom_call.1} parent=1 // pred_check_branch
      %55 = sbr.rel (0) target = $region21
    $region20: #{tpu_custom_call.1} parent=1 // pred_region
      %57 = dma.done [#allocation6], 1024
    $region21: #{tpu_custom_call.1} parent=1 // pred_fallthru
      _
    // Predicated region
    $region22: #{tpu_custom_call.1} parent=1 // pred_check
      _
    $region23: #{tpu_custom_call.1} parent=1 // pred_check_branch
      %59 = sbr.rel (0) target = $region25
    $region24: #{tpu_custom_call.1} parent=1 // pred_region
      %61 = dma.done [#allocation6], 768
    $region25: #{tpu_custom_call.1} parent=1 // pred_fallthru
      _
    %v62 = vld [vmem:[#allocation2] sm:$0xf]
    %v63 = vld [vmem:[#allocation2 + $0x4] sm:$0xf]
    %v64 = vld [vmem:[#allocation2 + $0x8] sm:$0xf]
    %v65 = vld [vmem:[#allocation2 + $0xc] sm:$0xf]
    %v66 = vld [vmem:[#allocation2 + $0x10] sm:$0xf]
    %v67 = vld [vmem:[#allocation2 + $0x14] sm:$0xf]
    %v68 = vld [vmem:[#allocation5] sm:$0xf]
    %v69 = vld [vmem:[#allocation5 + $0x4] sm:$0xf]
    %v70 = vld [vmem:[#allocation5 + $0x8] sm:$0xf]
    %v71 = vld [vmem:[#allocation5 + $0xc] sm:$0xf]
    %v72 = vld [vmem:[#allocation5 + $0x10] sm:$0xf]
    %v73 = vld [vmem:[#allocation5 + $0x14] sm:$0xf]
    %v74 = vld [vmem:[#allocation5 + $0x18] sm:$0xf]
    %v75 = vld [vmem:[#allocation5 + $0x1c] sm:$0xf]
    %v76 = vld [vmem:[#allocation5 + $0x20] sm:$0xf]
    %v77 = vld [vmem:[#allocation5 + $0x24] sm:$0xf]
    %v78 = vld [vmem:[#allocation5 + $0x28] sm:$0xf]
    %v79 = vld [vmem:[#allocation5 + $0x2c] sm:$0xf]
    %v80 = vld [vmem:[#allocation5 + $0x30] sm:$0xf]
    %v81 = vld [vmem:[#allocation5 + $0x34] sm:$0xf]
    %v82 = vld [vmem:[#allocation5 + $0x38] sm:$0xf]
    %v83 = vld [vmem:[#allocation5 + $0x3c] sm:$0xf]
    %v84 = vld [vmem:[#allocation7] sm:$0xff]
    %v85 = vld [vmem:[#allocation7 + $0x8] sm:$0xff]
    %v86 = vld [vmem:[#allocation7 + $0x10] sm:$0xff]
    %v87 = vld [vmem:[#allocation7 + $0x18] sm:$0xff]
    %v88 = vld [vmem:[#allocation7 + $0x20] sm:$0xff]
    %v89 = vld [vmem:[#allocation7 + $0x28] sm:$0xff]
    %v96 = vunpack.c.l.b16 %v62
    %v97 = vunpack.c.l.b16 %v63
    %v98 = vunpack.c.l.b16 %v64
    %v99 = vunpack.c.l.b16 %v65
    %v100 = vunpack.c.l.b16 %v66
    %v101 = vunpack.c.l.b16 %v67
    %v102 = vpack.c.b16 %v97, %v96
    %v103 = vpack.c.b16 %v99, %v98
    %v104 = vpack.c.b16 %v101, %v100
    %v124 = vunpack.c.l.b16 %v68
    %v125 = vunpack.c.l.b16 %v69
    %v126 = vunpack.c.l.b16 %v70
    %v127 = vunpack.c.l.b16 %v71
    %v128 = vunpack.c.l.b16 %v72
    %v129 = vunpack.c.l.b16 %v73
    %v130 = vunpack.c.l.b16 %v74
    %v131 = vunpack.c.l.b16 %v75
    %v132 = vunpack.c.l.b16 %v76
    %v133 = vunpack.c.l.b16 %v77
    %v134 = vunpack.c.l.b16 %v78
    %v135 = vunpack.c.l.b16 %v79
    %v136 = vunpack.c.l.b16 %v80
    %v137 = vunpack.c.l.b16 %v81
    %v138 = vunpack.c.l.b16 %v82
    %v139 = vunpack.c.l.b16 %v83
    %v140 = vpack.c.b16 %v125, %v124
    %v141 = vpack.c.b16 %v127, %v126
    %v142 = vpack.c.b16 %v129, %v128
    %v143 = vpack.c.b16 %v131, %v130
    %v144 = vpack.c.b16 %v133, %v132
    %v145 = vpack.c.b16 %v135, %v134
    %v146 = vpack.c.b16 %v137, %v136
    %v147 = vpack.c.b16 %v139, %v138
    %156 = vmatpush.bf16.msra.mxu0 %v147
    %157 = vmatpush.bf16.msra.mxu0 %v146
    %158 = vmatpush.bf16.msra.mxu0 %v145
    %159 = vmatpush.bf16.msra.mxu0 %v144
    %160 = vmatpush.bf16.msra.mxu0 %v143
    %161 = vmatpush.bf16.msra.mxu0 %v142
    %162 = vmatpush.bf16.msra.mxu0 %v141
    %163 = vmatpush.bf16.msra.mxu0 %v140
    %164 = vmatmul.bf16.gmra.mxu0 %v102
    %v165 = vpop.f32.mrf.mxu0
    %v166 = vadd.f32 %v84, %v165
    %v167 = vpop.f32.mrf.mxu0
    %v168 = vadd.f32 %v85, %v167
    %169 = vmatmul.bf16.gmra.mxu0 %v103
    %v170 = vpop.f32.mrf.mxu0
    %v171 = vadd.f32 %v86, %v170
    %v172 = vpop.f32.mrf.mxu0
    %v173 = vadd.f32 %v87, %v172
    %174 = vmatmul.bf16.gmra.mxu0 %v104
    %v175 = vpop.f32.mrf.mxu0
    %v176 = vadd.f32 %v88, %v175
    %v177 = vpop.f32.mrf.mxu0
    %v178 = vadd.f32 %v89, %v177
    %179 = vdwg.mxu0
    %180 = vst [vmem:[#allocation8] sm:$0xff] %v166
    %181 = vst [vmem:[#allocation8 + $0x8] sm:$0xff] %v168
    %182 = vst [vmem:[#allocation8 + $0x10] sm:$0xff] %v171
    %183 = vst [vmem:[#allocation8 + $0x18] sm:$0xff] %v173
    %184 = vst [vmem:[#allocation8 + $0x20] sm:$0xff] %v176
    %185 = vst [vmem:[#allocation8 + $0x28] sm:$0xff] %v178
    // Predicated region
    $region26: #{tpu_custom_call.1} parent=1 // pred_check
      _
    $region27: #{tpu_custom_call.1} parent=1 // pred_check_branch
      %187 = sbr.rel (0) target = $region29
    $region28: #{tpu_custom_call.1} parent=1 // pred_region
      %189 = vsyncadd [#allocation4], 0
      %s190 = sshll.u32 [#allocation8], 4
      %s191 = int_to_ptr.vmem [resolvable:$true] %s190
      %s192 = sshll.u32 %s3, 4
      %s193 = int_to_ptr.hbm [resolvable:$true] %s192
      %198 = dma.vmem_to_hbm [thread:$0]  %s191, 768, %s193, [#allocation4], 128, 128, 8
    $region29: #{tpu_custom_call.1} parent=1 // pred_fallthru
      _
    // Predicated region
    $region30: #{tpu_custom_call.1} parent=1 // pred_check
      _
    $region31: #{tpu_custom_call.1} parent=1 // pred_check_branch
      %200 = sbr.rel (0) target = $region33
    $region32: #{tpu_custom_call.1} parent=1 // pred_region
      %202 = dma.done [#allocation4], 768
    $region33: #{tpu_custom_call.1} parent=1 // pred_fallthru
      _
    %203 = vsyncpa [#allocation3], 1
    %204 = vsyncpa [#allocation6], 1
    %205 = vsyncpa [#allocation4], 1

</llo_original>
